<compile_context>
chip_gen: v6e
topology: v6e:2x2x1
jax: 0.10.0
libtpu: 0.0.40
codegen_flags: <defaults>
</compile_context>

<pallas_src>
import math

import jax
import jax.numpy as jnp
from jax.experimental import pallas as pl
from jax.experimental.pallas import tpu as pltpu

_LANE = 128
_MAX_C = 8192  # cap slab width so large tensors keep enough rows for the grid


def _make_scalar_mix_kernel(K):
    """Kernel computing sum_k w[k] * x_k for K separate input refs."""

    def kernel(w_ref, *refs):
        # w_ref:    SMEM (K,) f32 scalar-prefetch -- gamma * softmax(params)
        # refs[:K]: VMEM (tile_m, C) input tiles (one per mixed tensor)
        # refs[K]:  VMEM (tile_m, C) output tile
        o_ref = refs[K]
        acc = w_ref[0] * refs[0][...].astype(jnp.float32)
        for k in range(1, K):  # K is tiny & static -> fully unrolled VPU work
            acc = acc + w_ref[k] * refs[k][...].astype(jnp.float32)
        o_ref[...] = acc.astype(o_ref.dtype)

    return kernel


def _vmem_capacity_bytes():
    try:
        return int(pltpu.get_tpu_info().vmem_capacity_bytes)
    except Exception:
        return 64 * 2**20  # conservative fallback == v7x physical VMEM


def _mix_2d(xs2d, w, dtype, *, vmem_limit_bytes, tile_budget_bytes):
    """Run the Pallas mix on K identically-shaped (M, C) slabs, C % 128 == 0."""
    K = len(xs2d)
    M, C = xs2d[0].shape
    itemsize = jnp.dtype(dtype).itemsize
    sublane = {4: 8, 2: 16, 1: 32}.get(itemsize, 8)  # min packed sublane tile

    # Per-row VMEM cost: double-buffered (K inputs + 1 output) tiles, plus
    # headroom for the f32 intermediates from .astype(jnp.float32).
    io_per_row = 2 * (K + 1) * C * itemsize
    f32_per_row = 2 * C * 4
    max_rows = max(sublane, tile_budget_bytes // (io_per_row + f32_per_row))
    tile_m = min(M, (max_rows // sublane) * sublane)

    # Keep >= ~8 grid steps so "parallel" can shard across TensorCores on v7x
    # (2 TCs per chip); harmless on single-TC v5e/v6e.
    min_steps = 8
    if M >= min_steps * sublane:
        cap = max(sublane, ((-(-M // min_steps)) // sublane) * sublane)
        tile_m = min(tile_m, cap)

    grid = (pl.cdiv(M, tile_m),)
    kernel = _make_scalar_mix_kernel(K)

    return pl.pallas_call(
        kernel,
        out_shape=jax.ShapeDtypeStruct((M, C), dtype),
        grid_spec=pltpu.PrefetchScalarGridSpec(
            num_scalar_prefetch=1,
            grid=grid,
            in_specs=[
                pl.BlockSpec((tile_m, C), lambda i, _w: (i, 0)) for _ in range(K)
            ],
            out_specs=pl.BlockSpec((tile_m, C), lambda i, _w: (i, 0)),
        ),
        compiler_params=pltpu.CompilerParams(
            dimension_semantics=("parallel",),
            vmem_limit_bytes=vmem_limit_bytes,
        ),
    )(w, *xs2d)


def scalar_mix(tensors, scalar_parameters, gamma):
    """tensors: list of K arrays, all the same shape and dtype."""
    K = len(tensors)
    assert K >= 1
    assert scalar_parameters.reshape(-1).shape == (K,)
    shape = tensors[0].shape
    dtype = tensors[0].dtype
    for t in tensors:
        assert t.shape == shape and t.dtype == dtype

    N = math.prod(shape)

    # Tiny softmax over K scalars (glue, plain JAX); fold gamma into weights.
    w = jnp.asarray(gamma, jnp.float32).reshape(()) * jax.nn.softmax(
        scalar_parameters.astype(jnp.float32).reshape(-1), axis=0
    )

    # Generation-aware VMEM sizing: scoped limit at ~3/4 of physical capacity
    # (48 MiB on v7x, 96 MiB on v5e/v6e), tile budget slightly below that to
    # leave room for Mosaic scratch.
    vmem_cap = _vmem_capacity_bytes()
    vmem_limit = int(min((vmem_cap * 3) // 4, 96 * 2**20))
    tile_budget = int(max(vmem_limit - 8 * 2**20, 8 * 2**20))

    # ---- pick the lane-dense slab width C: largest multiple of 128 dividing N
    C = 0
    start = (min(N, _MAX_C) // _LANE) * _LANE
    for cand in range(start, 0, -_LANE):
        if N % cand == 0:
            C = cand
            break

    if C > 0:
        # Fully aligned: free (metadata-only) reshape of contiguous arrays.
        M = N // C
        xs = [t.reshape(M, C) for t in tensors]
        out = _mix_2d(xs, w, dtype,
                      vmem_limit_bytes=vmem_limit, tile_budget_bytes=tile_budget)
        return out.reshape(shape)

    # ---- N not a multiple of 128: kernel on the aligned bulk, tail in JAX ----
    flats = [t.reshape(-1) for t in tensors]
    bulk = (N // _LANE) * _LANE
    if bulk == 0:
        # Tiny tensor (< 128 elements): no Pallas payoff, pure-JAX weighted sum.
        acc = sum(w[k] * flats[k].astype(jnp.float32) for k in range(K))
        return acc.astype(dtype).reshape(shape)

    xs = [f[:bulk].reshape(bulk // _LANE, _LANE) for f in flats]
    out_bulk = _mix_2d(xs, w, dtype,
                       vmem_limit_bytes=vmem_limit,
                       tile_budget_bytes=tile_budget).reshape(-1)
    tail = sum(
        w[k] * flats[k][bulk:].astype(jnp.float32) for k in range(K)
    ).astype(dtype)
    # TODO(synk): the concatenate re-copies the bulk output; only hit when
    # the element count is not a multiple of 128.
    return jnp.concatenate([out_bulk, tail]).reshape(shape)


def scalar_mix_ref(tensors, scalar_parameters, gamma):
    w = jax.nn.softmax(scalar_parameters.astype(jnp.float32).reshape(-1), axis=0)
    acc = sum(w[k] * tensors[k].astype(jnp.float32) for k in range(len(tensors)))
    return (jnp.asarray(gamma, jnp.float32).reshape(()) * acc).astype(
        tensors[0].dtype
    )


if __name__ == "__main__":
    key = jax.random.PRNGKey(0)

    # Module config: mixture of K tensors, each (batch, timesteps, hidden).
    K = 3
    B, T, D = 2, 8, 32

    # Deterministic "parameters" mirroring __init__ (perturbed so softmax is
    # non-trivial); gamma initialized to 1.0 in the module.
    scalar_parameters = jnp.array([0.0 + 0.1 * i for i in range(K)], jnp.float32)
    gamma = jnp.float32(1.0)

    keys = jax.random.split(key, K)
    tensors = [jax.random.normal(k, (B, T, D), jnp.float32) for k in keys]

    out = scalar_mix(tensors, scalar_parameters, gamma)
    out = jax.block_until_ready(out)

    ref = scalar_mix_ref(tensors, scalar_parameters, gamma)
    assert out.shape == (B, T, D)
    assert jnp.allclose(out, ref, atol=1e-5, rtol=1e-5)

    print("KERNEL_OK")
</pallas_src>

<mosaic_0001>
module attributes {stable_mosaic.version = 11 : i64} {
  func.func @kernel(%arg0: i32, %arg1: memref<3xf32, #tpu.memory_space<smem>>, %arg2: memref<1x512xf32, #tpu.memory_space<vmem>>, %arg3: memref<1x512xf32, #tpu.memory_space<vmem>>, %arg4: memref<1x512xf32, #tpu.memory_space<vmem>>, %arg5: memref<1x512xf32, #tpu.memory_space<vmem>>) attributes {dimension_semantics = [#tpu.dimension_semantics<parallel>], iteration_bounds = array<i64: 1>, scalar_prefetch = 1 : i64, scratch_operands = 0 : i64, tpu.core_type = #tpu.core_type<tc>, window_params = [{transform_indices = @transform_0, window_bounds = array<i64: 1, 512>}, {transform_indices = @transform_1, window_bounds = array<i64: 1, 512>}, {transform_indices = @transform_2, window_bounds = array<i64: 1, 512>}, {transform_indices = @transform_3, window_bounds = array<i64: 1, 512>}]} {
    %c0 = arith.constant 0 : index
    %0 = memref.load %arg1[%c0] : memref<3xf32, #tpu.memory_space<smem>>
    %c0_0 = arith.constant 0 : index
    %c0_1 = arith.constant 0 : index
    %1 = vector.load %arg2[%c0_0, %c0_1] : memref<1x512xf32, #tpu.memory_space<vmem>>, vector<1x512xf32>
    %2 = vector.broadcast %0 : f32 to vector<1x512xf32>
    %3 = arith.mulf %2, %1 : vector<1x512xf32>
    %c1 = arith.constant 1 : index
    %4 = memref.load %arg1[%c1] : memref<3xf32, #tpu.memory_space<smem>>
    %c0_2 = arith.constant 0 : index
    %c0_3 = arith.constant 0 : index
    %5 = vector.load %arg3[%c0_2, %c0_3] : memref<1x512xf32, #tpu.memory_space<vmem>>, vector<1x512xf32>
    %6 = vector.broadcast %4 : f32 to vector<1x512xf32>
    %7 = arith.mulf %6, %5 : vector<1x512xf32>
    %8 = arith.addf %3, %7 : vector<1x512xf32>
    %c2 = arith.constant 2 : index
    %9 = memref.load %arg1[%c2] : memref<3xf32, #tpu.memory_space<smem>>
    %c0_4 = arith.constant 0 : index
    %c0_5 = arith.constant 0 : index
    %10 = vector.load %arg4[%c0_4, %c0_5] : memref<1x512xf32, #tpu.memory_space<vmem>>, vector<1x512xf32>
    %11 = vector.broadcast %9 : f32 to vector<1x512xf32>
    %12 = arith.mulf %11, %10 : vector<1x512xf32>
    %13 = arith.addf %8, %12 : vector<1x512xf32>
    %c0_6 = arith.constant 0 : index
    %c0_7 = arith.constant 0 : index
    %14 = vector.load %arg5[%c0_6, %c0_7] : memref<1x512xf32, #tpu.memory_space<vmem>>, vector<1x512xf32>
    tpu.vector_store %arg5[%c0_6, %c0_7], %13 {strides = array<i32>} : memref<1x512xf32, #tpu.memory_space<vmem>>, vector<1x512xf32>,
    return
  }
  func.func @transform_0(%arg0: i32, %arg1: memref<3xf32, #tpu.memory_space<smem>>) -> (i32, i32) {
    %c0_i32 = arith.constant 0 : i32
    %c0_i32_0 = arith.constant 0 : i32
    return %arg0, %c0_i32 : i32, i32
  }
  func.func @transform_1(%arg0: i32, %arg1: memref<3xf32, #tpu.memory_space<smem>>) -> (i32, i32) {
    %c0_i32 = arith.constant 0 : i32
    %c0_i32_0 = arith.constant 0 : i32
    return %arg0, %c0_i32 : i32, i32
  }
  func.func @transform_2(%arg0: i32, %arg1: memref<3xf32, #tpu.memory_space<smem>>) -> (i32, i32) {
    %c0_i32 = arith.constant 0 : i32
    %c0_i32_0 = arith.constant 0 : i32
    return %arg0, %c0_i32 : i32, i32
  }
  func.func @transform_3(%arg0: i32, %arg1: memref<3xf32, #tpu.memory_space<smem>>) -> (i32, i32) {
    %c0_i32 = arith.constant 0 : i32
    %c0_i32_0 = arith.constant 0 : i32
    return %arg0, %c0_i32 : i32, i32
  }
}

</mosaic_0001>

<llo_original>
// kernel: tpu_custom_call.1
$region0: #{tpu_custom_call.1}
  #allocation0 [shape = 'u32[]', space=smem, size = 0x4, offset = 0x4, fixed_abs, tag = 'smem constant byte address 0x4 - core index']
  #allocation1 [shape = 'u32[144,128]{1,0:T(1,128)}', space=vmem, size = 0x12000, scoped, tag = 'internal scratch']
  #allocation2 [shape = 's32[1]{0}', space=sflag, size = 0x4, scoped, tag = 'scoped memory for tpu_custom_call.1']
  #allocation3 [shape = 'u8[512]{0}', space=smem, size = 0x200, scoped, tag = 'prefetched SMEM operand 0']
  %s0 = inlined_call_operand.hbm [shape: f32[3], index: 0, kind: input, shape index: {}]
  %s1 = inlined_call_operand.hbm [shape: f32[1,512], index: 1, kind: input, shape index: {}]
  %s2 = inlined_call_operand.hbm [shape: f32[1,512], index: 2, kind: input, shape index: {}]
  %s3 = inlined_call_operand.vmem [shape: f32[1,512], index: 3, kind: input, shape index: {}]
  %s4 = inlined_call_operand.hbm [shape: f32[1,512], index: 4, kind: output, shape index: {}]
  %s5 = sld [smem:[#allocation0]]
  $region30: #{tpu_custom_call.1} parent=0
    _
  %s7 = ssub.s32 1, %s5
  %s8 = scalar_select 0, %s7, %s5
  %10 = dma.hbm_to_smem %s0, 16, [#allocation3], [#allocation2]
  %11 = dma.done [#allocation2], 16
  %12 = sfence
  $region1: #{tpu_custom_call.1} parent=0
    #allocation4 [shape = 'u8[2048]{0}', space=vmem, size = 0x800, scoped, tag = 'input window, operand 1, single buffered']
    #allocation5 [shape = 's32[1]{0}', space=sflag, size = 0x4, scoped, tag = 'scoped memory for tpu_custom_call.1']
    #allocation6 [shape = 's32[1]{0}', space=sflag, size = 0x4, scoped, tag = 'scoped memory for tpu_custom_call.1']
    #allocation7 [shape = 'u8[2048]{0}', space=vmem, size = 0x800, scoped, tag = 'input window, operand 2, single buffered']
    #allocation8 [shape = 's32[1]{0}', space=sflag, size = 0x4, scoped, tag = 'scoped memory for tpu_custom_call.1']
    #allocation9 [shape = 'u8[2048]{0}', space=vmem, size = 0x800, scoped, tag = 'output window, operand 0, single buffered']
    %13 = vsyncpa [#allocation5], 0
    %14 = vsyncpa [#allocation8], 0
    %15 = vsyncpa [#allocation6], 0
    // Predicated region
    $region2: #{tpu_custom_call.1} parent=1 // pred_check
      _
    $region3: #{tpu_custom_call.1} parent=1 // pred_check_branch
      %17 = sbr.rel (0) target = $region5
    $region4: #{tpu_custom_call.1} parent=1 // pred_region
      %s19 = ssub.s32 64, 64
      %20 = vsyncadd [#allocation5], %s19
      %s22 = sshll.u32 [#allocation4], 4
      %s23 = int_to_ptr.vmem [resolvable:$true] %s22
      %25 = dma.hbm_to_vmem [thread:$0]  %s1, 64, %s23, [#allocation5]
    $region5: #{tpu_custom_call.1} parent=1 // pred_fallthru
      _
    // Predicated region
    $region6: #{tpu_custom_call.1} parent=1 // pred_check
      _
    $region7: #{tpu_custom_call.1} parent=1 // pred_check_branch
      %27 = sbr.rel (0) target = $region9
    $region8: #{tpu_custom_call.1} parent=1 // pred_region
      %s29 = ssub.s32 64, 64
      %30 = vsyncadd [#allocation8], %s29
      %s32 = sshll.u32 [#allocation7], 4
      %s33 = int_to_ptr.vmem [resolvable:$true] %s32
      %35 = dma.hbm_to_vmem [thread:$0]  %s2, 64, %s33, [#allocation8]
    $region9: #{tpu_custom_call.1} parent=1 // pred_fallthru
      _
    // Predicated region
    $region10: #{tpu_custom_call.1} parent=1 // pred_check
      _
    $region11: #{tpu_custom_call.1} parent=1 // pred_check_branch
      %37 = sbr.rel (0) target = $region13
    $region12: #{tpu_custom_call.1} parent=1 // pred_region
      _
    $region13: #{tpu_custom_call.1} parent=1 // pred_fallthru
      _
    // Predicated region
    $region14: #{tpu_custom_call.1} parent=1 // pred_check
      _
    $region15: #{tpu_custom_call.1} parent=1 // pred_check_branch
      %39 = sbr.rel (0) target = $region17
    $region16: #{tpu_custom_call.1} parent=1 // pred_region
      %40 = dma.done [#allocation5], 64
    $region17: #{tpu_custom_call.1} parent=1 // pred_fallthru
      _
    // Predicated region
    $region18: #{tpu_custom_call.1} parent=1 // pred_check
      _
    $region19: #{tpu_custom_call.1} parent=1 // pred_check_branch
      %42 = sbr.rel (0) target = $region21
    $region20: #{tpu_custom_call.1} parent=1 // pred_region
      %43 = dma.done [#allocation8], 64
    $region21: #{tpu_custom_call.1} parent=1 // pred_fallthru
      _
    %s44 = sld [smem:[#allocation3]]
    %v45 = vld [vmem:[#allocation4] sm:$0xf]
    %v46 = vstv %s44
    %v47 = vmul.f32 %v46, %v45
    %s48 = sld [smem:[#allocation3 + $0x1]]
    %v49 = vld [vmem:[#allocation7] sm:$0xf]
    %v50 = vstv %s48
    %v51 = vmul.f32 %v50, %v49
    %v52 = vadd.f32 %v47, %v51
    %s53 = sld [smem:[#allocation3 + $0x2]]
    %v54 = vld [vmem:[%s3] sm:$0xf]
    %v55 = vstv %s53
    %v56 = vmul.f32 %v55, %v54
    %v57 = vadd.f32 %v52, %v56
    %v58 = vlaneseq
    %vm59 = vcmp.ge.s32.totalorder %v58, 0
    %vm60 = vcmp.lt.s32.totalorder %v58, 512
    %vm61 = vmand %vm59, %vm60
    %62 = vst.msk [vmem:[#allocation9] sm:$0xf] %vm61, %v57
    // Predicated region
    $region22: #{tpu_custom_call.1} parent=1 // pred_check
      _
    $region23: #{tpu_custom_call.1} parent=1 // pred_check_branch
      %64 = sbr.rel (0) target = $region25
    $region24: #{tpu_custom_call.1} parent=1 // pred_region
      %s66 = ssub.s32 64, 64
      %67 = vsyncadd [#allocation6], %s66
      %s69 = sshll.u32 [#allocation9], 4
      %s70 = int_to_ptr.vmem [resolvable:$true] %s69
      %72 = dma.vmem_to_hbm [thread:$0]  %s70, 64, %s4, [#allocation6]
    $region25: #{tpu_custom_call.1} parent=1 // pred_fallthru
      _
    // Predicated region
    $region26: #{tpu_custom_call.1} parent=1 // pred_check
      _
    $region27: #{tpu_custom_call.1} parent=1 // pred_check_branch
      %74 = sbr.rel (0) target = $region29
    $region28: #{tpu_custom_call.1} parent=1 // pred_region
      %75 = dma.done [#allocation6], 64
    $region29: #{tpu_custom_call.1} parent=1 // pred_fallthru
      _
    %76 = vsyncpa [#allocation5], 1
    %77 = vsyncpa [#allocation8], 1
    %78 = vsyncpa [#allocation6], 1

</llo_original>
